<compile_context>
chip_gen: v6e
topology: v6e:2x2x1
jax: 0.10.0
libtpu: 0.0.40
codegen_flags: <defaults>
</compile_context>

<pallas_src>
import functools
import math

import jax
import jax.numpy as jnp
from jax.experimental import pallas as pl
from jax.experimental.pallas import tpu as pltpu

INDIVIDUALITY = 0.4


def _round_up(x, m):
    return ((x + m - 1) // m) * m


def _positive_fit_loss_kernel(y_pred_ref, y_true_ref, rand_ref, out_ref, *,
                              ng_scale):
    # Cast in-kernel; compute in f32 (safe on all generations incl. v5e).
    y_pred = y_pred_ref[...].astype(jnp.float32)   # (B, TN)
    y_true = y_true_ref[...].astype(jnp.float32)   # (B, TN)
    rand = rand_ref[...].astype(jnp.float32)       # (B, TN)

    # ng_rate = individuality * sum(y_true, dim=0) / sum(y_true + (1-y_true), dim=0)
    #         = (individuality / B) * sum(y_true, dim=0)      (denominator == B)
    ng_rate = ng_scale * jnp.sum(y_true, axis=0, keepdims=True)   # (1, TN)

    # y_false = 1 - y_true, zeroed where rand > ng_rate.
    y_false = jnp.where(rand > ng_rate, 0.0, 1.0 - y_true)        # (B, TN)

    # Elementwise loss; single negation at the end.
    elem = y_true * jnp.log(y_pred) + y_false * jnp.log(1.0 - y_pred)
    partial = -jnp.sum(elem)                                      # f32 scalar

    # Lane-dense (1, 128) store of the per-tile partial (lane 0 read outside).
    out_ref[...] = jnp.broadcast_to(partial, (1, 128))


def positive_fit_loss(y_pred, y_true, rand, individuality=INDIVIDUALITY,
                      tn=2048):
    """Pallas implementation of Positive_Fit_Loss.forward.

    `rand` plays the role of torch.rand_like(y_true) (supplied explicitly so
    the op is deterministic / reproducible).
    """
    assert y_pred.shape == y_true.shape == rand.shape
    B = y_pred.shape[0]
    N = math.prod(y_pred.shape[1:]) if y_pred.ndim > 1 else 1

    # Flatten everything but the batch axis onto the lane axis.
    y_pred2 = y_pred.reshape(B, N)
    y_true2 = y_true.reshape(B, N)
    rand2 = rand.reshape(B, N)

    # Lane tile size: multiple of 128, no larger than the (rounded-up) problem.
    tn = max(128, min(tn, _round_up(N, 128)))
    n_pad = _round_up(N, tn)
    if n_pad != N:
        # Pad with values that contribute exactly zero loss:
        #   y_true=0 -> term1 = 0 ; rand=1 > ng_rate=0 -> y_false=0 -> term2 = 0.
        pad = n_pad - N
        y_pred2 = jnp.pad(y_pred2, ((0, 0), (0, pad)), constant_values=0.5)
        y_true2 = jnp.pad(y_true2, ((0, 0), (0, pad)), constant_values=0.0)
        rand2 = jnp.pad(rand2, ((0, 0), (0, pad)), constant_values=1.0)
    num_tiles = n_pad // tn

    kernel = functools.partial(_positive_fit_loss_kernel,
                               ng_scale=float(individuality) / float(B))

    partials = pl.pallas_call(
        kernel,
        out_shape=jax.ShapeDtypeStruct((1, 128 * num_tiles), jnp.float32),
        grid=(num_tiles,),
        in_specs=[
            pl.BlockSpec((B, tn), lambda j: (0, j)),
            pl.BlockSpec((B, tn), lambda j: (0, j)),
            pl.BlockSpec((B, tn), lambda j: (0, j)),
        ],
        out_specs=pl.BlockSpec((1, 128), lambda j: (0, j)),
        compiler_params=pltpu.CompilerParams(
            dimension_semantics=("parallel",)),
    )(y_pred2, y_true2, rand2)

    # Each tile broadcast its scalar partial across its 128 output lanes;
    # pick lane 0 of each tile and sum (exact per-tile scalars, tiny array).
    return jnp.sum(partials[0, ::128])


def _reference(y_pred, y_true, rand, individuality=INDIVIDUALITY):
    # Literal transcription of the PyTorch module's forward.
    ng_rate = individuality * jnp.sum(y_true, axis=0) / jnp.sum(
        y_true + (1.0 - y_true), axis=0)
    y_false = jnp.where(rand > ng_rate[None, ...], 0.0, 1.0 - y_true)
    return jnp.sum(-1.0 * y_true * jnp.log(y_pred)
                   - y_false * jnp.log(1.0 - y_pred))


if __name__ == "__main__":
    key = jax.random.PRNGKey(0)
    k_logit, k_label, k_rand = jax.random.split(key, 3)

    # Small multi-dim shape; the wrapper flattens dims 1.. onto the lane axis.
    B, C, F = 8, 4, 256            # -> (B, N) = (8, 1024)
    shape = (B, C, F)

    # Predictions in (0, 1) (the module ships a Sigmoid; log expects probs).
    logits = jax.random.normal(k_logit, shape, dtype=jnp.float32)
    y_pred = jax.nn.sigmoid(logits)
    # Binary targets in {0, 1}.
    y_true = (jax.random.uniform(k_label, shape) > 0.5).astype(jnp.float32)
    # Uniform randoms standing in for torch.rand_like(y_true).
    rand = jax.random.uniform(k_rand, shape, dtype=jnp.float32)

    # tn=256 -> 4 lane tiles, exercising the pipelined / parallel grid.
    loss = positive_fit_loss(y_pred, y_true, rand, tn=256)
    jax.block_until_ready(loss)

    ref = _reference(y_pred, y_true, rand)
    assert jnp.allclose(loss, ref, rtol=1e-5, atol=1e-3), (loss, ref)

    print("KERNEL_OK")
</pallas_src>

<mosaic_0001>
module attributes {stable_mosaic.version = 11 : i64} {
  func.func @_positive_fit_loss_kernel(%arg0: i32, %arg1: memref<8x256xf32, #tpu.memory_space<vmem>>, %arg2: memref<8x256xf32, #tpu.memory_space<vmem>>, %arg3: memref<8x256xf32, #tpu.memory_space<vmem>>, %arg4: memref<1x128xf32, #tpu.memory_space<vmem>>) attributes {dimension_semantics = [#tpu.dimension_semantics<parallel>], iteration_bounds = array<i64: 4>, scalar_prefetch = 0 : i64, scratch_operands = 0 : i64, tpu.core_type = #tpu.core_type<tc>, window_params = [{transform_indices = @transform_0, window_bounds = array<i64: 8, 256>}, {transform_indices = @transform_1, window_bounds = array<i64: 8, 256>}, {transform_indices = @transform_2, window_bounds = array<i64: 8, 256>}, {transform_indices = @transform_3, window_bounds = array<i64: 1, 128>}]} {
    %c0 = arith.constant 0 : index
    %c0_0 = arith.constant 0 : index
    %0 = vector.load %arg1[%c0, %c0_0] : memref<8x256xf32, #tpu.memory_space<vmem>>, vector<8x256xf32>
    %c0_1 = arith.constant 0 : index
    %c0_2 = arith.constant 0 : index
    %1 = vector.load %arg2[%c0_1, %c0_2] : memref<8x256xf32, #tpu.memory_space<vmem>>, vector<8x256xf32>
    %c0_3 = arith.constant 0 : index
    %c0_4 = arith.constant 0 : index
    %2 = vector.load %arg3[%c0_3, %c0_4] : memref<8x256xf32, #tpu.memory_space<vmem>>, vector<8x256xf32>
    %cst = arith.constant dense<0.000000e+00> : vector<256xf32>
    %3 = vector.multi_reduction <add>, %1, %cst [0] : vector<8x256xf32> to vector<256xf32>
    %4 = vector.shape_cast %3 : vector<256xf32> to vector<1x256xf32>
    %cst_5 = arith.constant 5.000000e-02 : f32
    %5 = vector.broadcast %cst_5 : f32 to vector<1x256xf32>
    %6 = arith.mulf %5, %4 : vector<1x256xf32>
    %7 = vector.broadcast %6 : vector<1x256xf32> to vector<8x256xf32>
    %8 = arith.cmpf ogt, %2, %7 : vector<8x256xf32>
    %cst_6 = arith.constant 1.000000e+00 : f32
    %9 = vector.broadcast %cst_6 : f32 to vector<8x256xf32>
    %10 = arith.subf %9, %1 : vector<8x256xf32>
    %cst_7 = arith.constant 0.000000e+00 : f32
    %11 = vector.broadcast %cst_7 : f32 to vector<8x256xf32>
    %12 = arith.select %8, %11, %10 : vector<8x256xi1>, vector<8x256xf32>
    %13 = math.log %0 : vector<8x256xf32>
    %14 = arith.mulf %1, %13 : vector<8x256xf32>
    %cst_8 = arith.constant 1.000000e+00 : f32
    %15 = vector.broadcast %cst_8 : f32 to vector<8x256xf32>
    %16 = arith.subf %15, %0 : vector<8x256xf32>
    %17 = math.log %16 : vector<8x256xf32>
    %18 = arith.mulf %12, %17 : vector<8x256xf32>
    %19 = arith.addf %14, %18 : vector<8x256xf32>
    %20 = vector.shape_cast %19 : vector<8x256xf32> to vector<1x8x256xf32>
    %cst_9 = arith.constant dense<0.000000e+00> : vector<1xf32>
    %21 = vector.multi_reduction <add>, %20, %cst_9 [1, 2] : vector<1x8x256xf32> to vector<1xf32>
    %22 = vector.shape_cast %21 : vector<1xf32> to vector<1x1x1xf32>
    %23 = vector.extract %22[0, 0, 0] : f32 from vector<1x1x1xf32>
    %cst_10 = arith.constant 0.000000e+00 : f32
    %24 = arith.subf %cst_10, %23 : f32
    %25 = vector.broadcast %24 : f32 to vector<1x128xf32>
    %c0_11 = arith.constant 0 : index
    %c0_12 = arith.constant 0 : index
    %26 = vector.load %arg4[%c0_11, %c0_12] : memref<1x128xf32, #tpu.memory_space<vmem>>, vector<1x128xf32>
    tpu.vector_store %arg4[%c0_11, %c0_12], %25 {strides = array<i32>} : memref<1x128xf32, #tpu.memory_space<vmem>>, vector<1x128xf32>,
    return
  }
  func.func @transform_0(%arg0: i32) -> (i32, i32) {
    %c0_i32 = arith.constant 0 : i32
    %c0_i32_0 = arith.constant 0 : i32
    return %c0_i32, %arg0 : i32, i32
  }
  func.func @transform_1(%arg0: i32) -> (i32, i32) {
    %c0_i32 = arith.constant 0 : i32
    %c0_i32_0 = arith.constant 0 : i32
    return %c0_i32, %arg0 : i32, i32
  }
  func.func @transform_2(%arg0: i32) -> (i32, i32) {
    %c0_i32 = arith.constant 0 : i32
    %c0_i32_0 = arith.constant 0 : i32
    return %c0_i32, %arg0 : i32, i32
  }
  func.func @transform_3(%arg0: i32) -> (i32, i32) {
    %c0_i32 = arith.constant 0 : i32
    %c0_i32_0 = arith.constant 0 : i32
    return %c0_i32, %arg0 : i32, i32
  }
}

</mosaic_0001>

<llo_original>
// kernel: tpu_custom_call.1
$region0: #{tpu_custom_call.1}
  #allocation0 [shape = 'u32[]', space=smem, size = 0x4, offset = 0x4, fixed_abs, tag = 'smem constant byte address 0x4 - core index']
  #allocation1 [shape = 'u32[144,128]{1,0:T(1,128)}', space=vmem, size = 0x12000, scoped, tag = 'internal scratch']
  %s0 = inlined_call_operand.hbm [shape: f32[8,1024], index: 0, kind: input, shape index: {}]
  %s1 = inlined_call_operand.hbm [shape: f32[8,1024], index: 1, kind: input, shape index: {}]
  %s2 = inlined_call_operand.hbm [shape: f32[8,1024], index: 2, kind: input, shape index: {}]
  %s3 = inlined_call_operand.hbm [shape: f32[1,512], index: 3, kind: output, shape index: {}]
  %s4 = sld [smem:[#allocation0]]
  $region57: #{tpu_custom_call.1} parent=0
    _
  %s6 = ssub.s32 1, %s4
  %s7 = scalar_select 0, %s6, %s4
  $region1: #{tpu_custom_call.1} parent=0
    #allocation2 [shape = 'u8[16384]{0}', space=vmem, size = 0x4000, scoped, tag = 'input window, operand 0']
    #allocation3 [shape = 's32[2]{0}', space=sflag, size = 0x8, scoped, tag = 'scoped memory for tpu_custom_call.1']
    #allocation4 [shape = 's32[2]{0}', space=sflag, size = 0x8, scoped, tag = 'scoped memory for tpu_custom_call.1']
    #allocation5 [shape = 'u8[16384]{0}', space=vmem, size = 0x4000, scoped, tag = 'input window, operand 1']
    #allocation6 [shape = 's32[2]{0}', space=sflag, size = 0x8, scoped, tag = 'scoped memory for tpu_custom_call.1']
    #allocation7 [shape = 'u8[16384]{0}', space=vmem, size = 0x4000, scoped, tag = 'input window, operand 2']
    #allocation8 [shape = 'u8[1024]{0}', space=vmem, size = 0x400, scoped, tag = 'output window, operand 0']
    %8 = vsyncpa [#allocation3], 0
    %s9 = scalar_lea.sflag [#allocation3], 1
    %10 = vsyncpa %s9, 0
    %11 = vsyncpa [#allocation6], 0
    %s12 = scalar_lea.sflag [#allocation6], 1
    %13 = vsyncpa %s12, 0
    %14 = vsyncpa [#allocation4], 0
    %s15 = scalar_lea.sflag [#allocation4], 1
    %16 = vsyncpa %s15, 0
    loop: start=0, step=1, limit=6
    $region2: #{tpu_custom_call.1} parent=1 // loop_pre_header
      _
    $region3: #{tpu_custom_call.1} parent=1 // loop_header
      %s18 = sphi 0, %s22
      %p19 = scmp.ge.s32.totalorder %s18, 6
      %s28 = sphi 0, %s30
      %s31 = sphi 0, %s28
      %s32 = sphi 0, %s31
      %s48 = sphi 0, %s32
      %s54 = sphi 0, %s56
      %s57 = sphi 0, %s54
      %s58 = sphi 0, %s57
      %s74 = sphi 0, %s58
      %s80 = sphi 0, %s82
      %s83 = sphi 0, %s80
      %s84 = sphi 0, %s83
      %s100 = sphi 0, %s84
      %s106 = sphi 0, %s108
      %s109 = sphi 0, %s106
      %s110 = sphi 0, %s109
      %s126 = sphi 0, %s110
    $region4: #{tpu_custom_call.1} parent=1 // loop_header_branch
      %21 = sbr.rel (%p19) target = $region8
    $region5: #{tpu_custom_call.1} parent=1 // loop_body
      %s23 = ssub.s32 %s18, 1
      %s24 = ssub.s32 %s18, 2
      %s25 = sadd.s32 %s18, 1
      %s26 = ssub.s32 %s18, %s25
      %p27 = scmp.eq.s32.totalorder %s26, 0
      %s29 = sadd.s32 %s28, 1
      %s30 = scalar_select %p27, %s28, %s29
      %p33 = pneg %p27
      %p34 = scmp.eq.s32.totalorder %s18, 3
      %p35 = por %p33, %p34
      %p36 = scmp.ne.s32.totalorder %s28, %s31
      %p37 = scmp.eq.s32.totalorder %s18, 0
      %p38 = por %p36, %p37
      %p39 = scmp.ne.s32.totalorder %s28, %s31
      %p40 = scmp.eq.s32.totalorder %s23, 3
      %p41 = por %p39, %p40
      %p42 = scmp.ne.s32.totalorder %s31, %s32
      %p43 = scmp.eq.s32.totalorder %s23, 0
      %p44 = por %p42, %p43
      %p45 = scmp.ne.s32.totalorder %s31, %s32
      %p46 = scmp.eq.s32.totalorder %s24, 3
      %p47 = por %p45, %p46
      %p49 = scmp.ne.s32.totalorder %s32, %s48
      %p50 = scmp.eq.s32.totalorder %s24, 0
      %p51 = por %p49, %p50
      %s52 = ssub.s32 %s18, %s25
      %p53 = scmp.eq.s32.totalorder %s52, 0
      %s55 = sadd.s32 %s54, 1
      %s56 = scalar_select %p53, %s54, %s55
      %p59 = pneg %p53
      %p60 = scmp.eq.s32.totalorder %s18, 3
      %p61 = por %p59, %p60
      %p62 = scmp.ne.s32.totalorder %s54, %s57
      %p63 = scmp.eq.s32.totalorder %s18, 0
      %p64 = por %p62, %p63
      %p65 = scmp.ne.s32.totalorder %s54, %s57
      %p66 = scmp.eq.s32.totalorder %s23, 3
      %p67 = por %p65, %p66
      %p68 = scmp.ne.s32.totalorder %s57, %s58
      %p69 = scmp.eq.s32.totalorder %s23, 0
      %p70 = por %p68, %p69
      %p71 = scmp.ne.s32.totalorder %s57, %s58
      %p72 = scmp.eq.s32.totalorder %s24, 3
      %p73 = por %p71, %p72
      %p75 = scmp.ne.s32.totalorder %s58, %s74
      %p76 = scmp.eq.s32.totalorder %s24, 0
      %p77 = por %p75, %p76
      %s78 = ssub.s32 %s18, %s25
      %p79 = scmp.eq.s32.totalorder %s78, 0
      %s81 = sadd.s32 %s80, 1
      %s82 = scalar_select %p79, %s80, %s81
      %p85 = pneg %p79
      %p86 = scmp.eq.s32.totalorder %s18, 3
      %p87 = por %p85, %p86
      %p88 = scmp.ne.s32.totalorder %s80, %s83
      %p89 = scmp.eq.s32.totalorder %s18, 0
      %p90 = por %p88, %p89
      %p91 = scmp.ne.s32.totalorder %s80, %s83
      %p92 = scmp.eq.s32.totalorder %s23, 3
      %p93 = por %p91, %p92
      %p94 = scmp.ne.s32.totalorder %s83, %s84
      %p95 = scmp.eq.s32.totalorder %s23, 0
      %p96 = por %p94, %p95
      %p97 = scmp.ne.s32.totalorder %s83, %s84
      %p98 = scmp.eq.s32.totalorder %s24, 3
      %p99 = por %p97, %p98
      %p101 = scmp.ne.s32.totalorder %s84, %s100
      %p102 = scmp.eq.s32.totalorder %s24, 0
      %p103 = por %p101, %p102
      %s104 = ssub.s32 %s18, %s25
      %p105 = scmp.eq.s32.totalorder %s104, 0
      %s107 = sadd.s32 %s106, 1
      %s108 = scalar_select %p105, %s106, %s107
      %p111 = pneg %p105
      %p112 = scmp.eq.s32.totalorder %s18, 3
      %p113 = por %p111, %p112
      %p114 = scmp.ne.s32.totalorder %s106, %s109
      %p115 = scmp.eq.s32.totalorder %s18, 0
      %p116 = por %p114, %p115
      %p117 = scmp.ne.s32.totalorder %s106, %s109
      %p118 = scmp.eq.s32.totalorder %s23, 3
      %p119 = por %p117, %p118
      %p120 = scmp.ne.s32.totalorder %s109, %s110
      %p121 = scmp.eq.s32.totalorder %s23, 0
      %p122 = por %p120, %p121
      %p123 = scmp.ne.s32.totalorder %s109, %s110
      %p124 = scmp.eq.s32.totalorder %s24, 3
      %p125 = por %p123, %p124
      %p127 = scmp.ne.s32.totalorder %s110, %s126
      %p128 = scmp.eq.s32.totalorder %s24, 0
      %p129 = por %p127, %p128
      %p130 = scmp.le.s32.totalorder 1, %s18
      %p131 = scmp.lt.s32.totalorder %s18, 5
      %p132 = pnand %p130, %p131
      %p133 = pneg %p132
      // Predicated region
      $region9: #{tpu_custom_call.1} parent=5 // pred_check
        _
      $region10: #{tpu_custom_call.1} parent=5 // pred_check_branch
        %135 = sbr.rel (%p132) target = $region12
      $region11: #{tpu_custom_call.1} parent=5 // pred_region
        %s136 = ssub.s32 %s18, 1
      $region12: #{tpu_custom_call.1} parent=5 // pred_fallthru
        _
      %p137 = scmp.lt.s32.totalorder %s18, 4
      // Predicated region
      $region13: #{tpu_custom_call.1} parent=5 // pred_check
        %p138 = pneg %p137
      $region14: #{tpu_custom_call.1} parent=5 // pred_check_branch
        %140 = sbr.rel (%p138) target = $region16
      $region15: #{tpu_custom_call.1} parent=5 // pred_region
        // Predicated region
        $region17: #{tpu_custom_call.1} parent=15 // pred_check
          %p141 = pneg %p38
        $region18: #{tpu_custom_call.1} parent=15 // pred_check_branch
          %143 = sbr.rel (%p141) target = $region20
        $region19: #{tpu_custom_call.1} parent=15 // pred_region
          %s144 = sand.u32 %s28, 1
          %s145 = scalar_lea.sflag [#allocation3], %s144
          %s146 = sand.u32 %s28, 1
          %s147 = smul.addr %s146, 16
          %s148 = scalar_lea.vmem [#allocation2], %s147
          %s149 = smul.u32 2, %s18
          %s151 = ssub.s32 256, 256
          %152 = vsyncadd %s145, %s151
          %s153 = smul.addr %s149, 128
          %s154 = scalar_lea.hbm %s0, %s153
          %s156 = sshll.u32 %s148, 4
          %s157 = int_to_ptr.vmem [resolvable:$true] %s156
          %159 = dma.hbm_to_vmem [thread:$0]  %s154, 256, %s157, %s145
        $region20: #{tpu_custom_call.1} parent=15 // pred_fallthru
          _
        // Predicated region
        $region21: #{tpu_custom_call.1} parent=15 // pred_check
          %p160 = pneg %p64
        $region22: #{tpu_custom_call.1} parent=15 // pred_check_branch
          %162 = sbr.rel (%p160) target = $region24
        $region23: #{tpu_custom_call.1} parent=15 // pred_region
          %s163 = sand.u32 %s18, 1
          %s164 = scalar_lea.sflag [#allocation6], %s163
          %s165 = sand.u32 %s54, 1
          %s166 = smul.addr %s165, 16
          %s167 = scalar_lea.vmem [#allocation5], %s166
          %s168 = smul.u32 2, %s18
          %s170 = ssub.s32 256, 256
          %171 = vsyncadd %s164, %s170
          %s172 = smul.addr %s168, 128
          %s173 = scalar_lea.hbm %s1, %s172
          %s175 = sshll.u32 %s167, 4
          %s176 = int_to_ptr.vmem [resolvable:$true] %s175
          %178 = dma.hbm_to_vmem [thread:$0]  %s173, 256, %s176, %s164
        $region24: #{tpu_custom_call.1} parent=15 // pred_fallthru
          _
        // Predicated region
        $region25: #{tpu_custom_call.1} parent=15 // pred_check
          %p179 = pneg %p90
        $region26: #{tpu_custom_call.1} parent=15 // pred_check_branch
          %181 = sbr.rel (%p179) target = $region28
        $region27: #{tpu_custom_call.1} parent=15 // pred_region
          %s182 = sand.u32 %s18, 1
          %s183 = scalar_lea.sflag [#allocation6], %s182
          %s184 = sand.u32 %s80, 1
          %s185 = smul.addr %s184, 16
          %s186 = scalar_lea.vmem [#allocation7], %s185
          %s187 = smul.u32 2, %s18
          %s189 = ssub.s32 256, 256
          %190 = vsyncadd %s183, %s189
          %s191 = smul.addr %s187, 128
          %s192 = scalar_lea.hbm %s2, %s191
          %s194 = sshll.u32 %s186, 4
          %s195 = int_to_ptr.vmem [resolvable:$true] %s194
          %197 = dma.hbm_to_vmem [thread:$0]  %s192, 256, %s195, %s183
        $region28: #{tpu_custom_call.1} parent=15 // pred_fallthru
          _
      $region16: #{tpu_custom_call.1} parent=5 // pred_fallthru
        _
      %p198 = scmp.le.s32.totalorder 1, %s18
      %p199 = scmp.lt.s32.totalorder %s18, 5
      %p200 = pnand %p198, %p199
      %p201 = pneg %p200
      // Predicated region
      $region29: #{tpu_custom_call.1} parent=5 // pred_check
        _
      $region30: #{tpu_custom_call.1} parent=5 // pred_check_branch
        %203 = sbr.rel (%p200) target = $region32
      $region31: #{tpu_custom_call.1} parent=5 // pred_region
        %s204 = ssub.s32 %s18, 1
        %s205 = sand.u32 %s31, 1
        %s206 = scalar_lea.sflag [#allocation3], %s205
        %s207 = sand.u32 %s31, 1
        %s208 = smul.addr %s207, 16
        %s209 = scalar_lea.vmem [#allocation2], %s208
        // Predicated region
        $region33: #{tpu_custom_call.1} parent=31 // pred_check
          %p210 = pneg %p44
        $region34: #{tpu_custom_call.1} parent=31 // pred_check_branch
          %212 = sbr.rel (%p210) target = $region36
        $region35: #{tpu_custom_call.1} parent=31 // pred_region
          %213 = dma.done %s206, 256
        $region36: #{tpu_custom_call.1} parent=31 // pred_fallthru
          _
        %s214 = sand.u32 %s23, 1
        %s215 = scalar_lea.sflag [#allocation6], %s214
        %s216 = sand.u32 %s57, 1
        %s217 = smul.addr %s216, 16
        %s218 = scalar_lea.vmem [#allocation5], %s217
        // Predicated region
        $region37: #{tpu_custom_call.1} parent=31 // pred_check
          %p219 = pneg %p70
        $region38: #{tpu_custom_call.1} parent=31 // pred_check_branch
          %221 = sbr.rel (%p219) target = $region40
        $region39: #{tpu_custom_call.1} parent=31 // pred_region
          %222 = dma.done %s215, 256
        $region40: #{tpu_custom_call.1} parent=31 // pred_fallthru
          _
        %s223 = sand.u32 %s23, 1
        %s224 = scalar_lea.sflag [#allocation6], %s223
        %s225 = sand.u32 %s83, 1
        %s226 = smul.addr %s225, 16
        %s227 = scalar_lea.vmem [#allocation7], %s226
        // Predicated region
        $region41: #{tpu_custom_call.1} parent=31 // pred_check
          %p228 = pneg %p96
        $region42: #{tpu_custom_call.1} parent=31 // pred_check_branch
          %230 = sbr.rel (%p228) target = $region44
        $region43: #{tpu_custom_call.1} parent=31 // pred_region
          %231 = dma.done %s224, 256
        $region44: #{tpu_custom_call.1} parent=31 // pred_fallthru
          _
        %s232 = sand.u32 %s31, 1
        %s233 = scalar_lea.sflag [#allocation3], %s232
        %s234 = sand.u32 %s31, 1
        %s235 = smul.addr %s234, 16
        %s236 = scalar_lea.vmem [#allocation2], %s235
        %p237 = pneg %p44
        %p238 = pneg %p41
        %s239 = sand.u32 %s23, 1
        %s240 = scalar_lea.sflag [#allocation6], %s239
        %s241 = sand.u32 %s57, 1
        %s242 = smul.addr %s241, 16
        %s243 = scalar_lea.vmem [#allocation5], %s242
        %p244 = pneg %p70
        %p245 = pneg %p67
        %s246 = sand.u32 %s23, 1
        %s247 = scalar_lea.sflag [#allocation6], %s246
        %s248 = sand.u32 %s83, 1
        %s249 = smul.addr %s248, 16
        %s250 = scalar_lea.vmem [#allocation7], %s249
        %p251 = pneg %p96
        %p252 = pneg %p93
        %p253 = pneg %p122
        %p254 = pneg %p119
        %s255 = sand.u32 %s109, 1
        %s256 = scalar_lea.sflag [#allocation4], %s255
        %s257 = sand.u32 %s109, 1
        %s258 = scalar_lea.vmem [#allocation8], %s257
        %s259 = smul.u32 2, %s23
        %s260 = smul.u32 2, %s23
        %s261 = smul.u32 2, %s23
        %v262 = vld [vmem:[%s209] sm:$0xff]
        %v263 = vld [vmem:[%s209 + $0x8] sm:$0xff]
        %v264 = vld [vmem:[%s218] sm:$0xff]
        %v265 = vld [vmem:[%s218 + $0x8] sm:$0xff]
        %v266 = vld [vmem:[%s227] sm:$0xff]
        %v267 = vld [vmem:[%s227 + $0x8] sm:$0xff]
        %v268 = vrot.slane %v264, 4
        %v269 = vadd.f32 %v264, %v268
        %v270 = vrot.slane %v269, 2
        %v271 = vadd.f32 %v269, %v270
        %v272 = vrot.slane %v271, 1
        %v273 = vadd.f32 %v271, %v272
        %v274 = vrot.slane %v265, 4
        %v275 = vadd.f32 %v265, %v274
        %v276 = vrot.slane %v275, 2
        %v277 = vadd.f32 %v275, %v276
        %v278 = vrot.slane %v277, 1
        %v279 = vadd.f32 %v277, %v278
        %v280 = vmul.f32 %v273, 0.05
        %v281 = vmul.f32 %v279, 0.05
        %vm282 = vcmp.gt.f32.partialorder %v266, %v280
        %vm283 = vcmp.gt.f32.partialorder %v267, %v281
        %v284 = vsub.f32 1.0, %v264
        %v285 = vsub.f32 1.0, %v265
        %v286 = vsel %vm282, 0.0, %v284
        %v287 = vsel %vm283, 0.0, %v285
        %v288 = vlog2.pop %v262
        %v289 = vmul.f32 %v288, 0.6931472
        %v290 = vlog2.pop %v263
        %v291 = vmul.f32 %v290, 0.6931472
        %v292 = vmul.f32 %v264, %v289
        %v293 = vmul.f32 %v265, %v291
        %v294 = vsub.f32 1.0, %v262
        %v295 = vsub.f32 1.0, %v263
        %v296 = vlog2.pop %v294
        %v297 = vmul.f32 %v296, 0.6931472
        %v298 = vlog2.pop %v295
        %v299 = vmul.f32 %v298, 0.6931472
        %v300 = vmul.f32 %v286, %v297
        %v301 = vmul.f32 %v287, %v299
        %v302 = vadd.f32 %v292, %v300
        %v303 = vadd.f32 %v293, %v301
        %v304 = vadd.f32 %v302, %v303
        %305 = vadd.xlane.f32.xlu0 %v304
        %v306 = vpop.xlane.xlu0 %305
        %v307 = vrot.slane %v306, 4
        %v308 = vadd.f32 %v306, %v307
        %v309 = vrot.slane %v308, 2
        %v310 = vadd.f32 %v308, %v309
        %v311 = vrot.slane %v310, 1
        %v312 = vadd.f32 %v310, %v311
        %s313 = vtos %v312
        %s314 = ssub.f32 0.0, %s313
        %v315 = vstv %s314
        %316 = vst [vmem:[%s258] sm:$0x1] %v315
        %s317 = sand.u32 %s109, 1
        %s318 = scalar_lea.sflag [#allocation4], %s317
        %s319 = sand.u32 %s109, 1
        %s320 = scalar_lea.vmem [#allocation8], %s319
        // Predicated region
        $region45: #{tpu_custom_call.1} parent=31 // pred_check
          %p321 = pneg %p119
        $region46: #{tpu_custom_call.1} parent=31 // pred_check_branch
          %323 = sbr.rel (%p321) target = $region48
        $region47: #{tpu_custom_call.1} parent=31 // pred_region
          %s325 = ssub.s32 16, 16
          %326 = vsyncadd %s318, %s325
          %s327 = smul.addr %s23, 16
          %s328 = scalar_lea.hbm %s3, %s327
          %s330 = sshll.u32 %s320, 4
          %s331 = int_to_ptr.vmem [resolvable:$true] %s330
          %333 = dma.vmem_to_hbm [thread:$0]  %s331, 16, %s328, %s318
        $region48: #{tpu_custom_call.1} parent=31 // pred_fallthru
          _
      $region32: #{tpu_custom_call.1} parent=5 // pred_fallthru
        _
      %p334 = scmp.le.s32.totalorder 2, %s18
      // Predicated region
      $region49: #{tpu_custom_call.1} parent=5 // pred_check
        %p335 = pneg %p334
      $region50: #{tpu_custom_call.1} parent=5 // pred_check_branch
        %337 = sbr.rel (%p335) target = $region52
      $region51: #{tpu_custom_call.1} parent=5 // pred_region
        %s338 = ssub.s32 %s18, 2
        // Predicated region
        $region53: #{tpu_custom_call.1} parent=51 // pred_check
          %p339 = pneg %p125
        $region54: #{tpu_custom_call.1} parent=51 // pred_check_branch
          %341 = sbr.rel (%p339) target = $region56
        $region55: #{tpu_custom_call.1} parent=51 // pred_region
          %s342 = sand.u32 %s110, 1
          %s343 = scalar_lea.sflag [#allocation4], %s342
          %s344 = sand.u32 %s110, 1
          %s345 = scalar_lea.vmem [#allocation8], %s344
          %346 = dma.done %s343, 16
        $region56: #{tpu_custom_call.1} parent=51 // pred_fallthru
          _
      $region52: #{tpu_custom_call.1} parent=5 // pred_fallthru
        _
    $region6: #{tpu_custom_call.1} parent=1 // loop_footer
      %s22 = sadd.s32 1, %s18
    $region7: #{tpu_custom_call.1} parent=1 // loop_footer_branch
      %17 = sbr.rel target = $region3
    $region8: #{tpu_custom_call.1} parent=1 // loop_exit
      _
    %347 = vsyncpa [#allocation3], 1
    %s348 = scalar_lea.sflag [#allocation3], 1
    %349 = vsyncpa %s348, 1
    %350 = vsyncpa [#allocation6], 1
    %s351 = scalar_lea.sflag [#allocation6], 1
    %352 = vsyncpa %s351, 1
    %353 = vsyncpa [#allocation4], 1
    %s354 = scalar_lea.sflag [#allocation4], 1
    %355 = vsyncpa %s354, 1

</llo_original>
